<compile_context>
chip_gen: v7x
topology: tpu7x:2x2x1
jax: 0.10.0
libtpu: 0.0.40
codegen_flags: <defaults>
</compile_context>

<pallas_src>
import functools

import jax
import jax.numpy as jnp
from jax import lax
from jax.experimental import pallas as pl
from jax.experimental.pallas import tpu as pltpu

_LANES = 128
_SUBLANES = 8
_MAX_CHUNK_ROWS = 256        # rows per in-kernel compute chunk
_PER_TEMP_BYTES = 1 << 20    # target size of one chunk-wide f32 temporary
_NUM_LIVE_TEMPS = 6          # conservative count of live chunk temporaries


def _round_up(v, m):
    return (v + m - 1) // m * m


def _device_config():
    """Returns (num_core_splits, vmem_footprint_budget_bytes, vmem_limit_bytes)."""
    kind = ""
    try:
        kind = jax.devices()[0].device_kind.lower()
    except Exception:
        pass
    if "v7" in kind or "7x" in kind:
        # 2 TensorCores/chip, 64 MiB physical VMEM per core.
        return 2, 24 << 20, 32 << 20
    if "v6" in kind:
        # 1 TensorCore, 128 MiB physical VMEM.
        return 1, 56 << 20, 80 << 20
    if "v5p" in kind or "v4" in kind:
        # Megacore chips: 2 TensorCores/chip.
        return 2, 40 << 20, 56 << 20
    if "v5" in kind:
        # v5e ("TPU v5 lite"): 1 TC, 128 MiB physical (16 MiB default scoped).
        return 1, 40 << 20, 56 << 20
    # Unknown backend (e.g. interpret mode): stay conservative.
    return 1, 16 << 20, 24 << 20


def _plan_tiles(n, c, itemsize, vmem_budget, tile_rows=None):
    """Pick (tile_n, rows_per_chunk) from the per-core VMEM byte budget."""
    c_pad = _round_up(c, _LANES)
    chunk = min(_MAX_CHUNK_ROWS,
                max(_SUBLANES,
                    (_PER_TEMP_BYTES // (c_pad * 4)) // _SUBLANES * _SUBLANES))
    n_pad = _round_up(n, _SUBLANES)

    if tile_rows is None:
        temps = _NUM_LIVE_TEMPS * chunk * c_pad * 4           # chunk f32 temps
        out_block = 2 * _SUBLANES * c_pad * 4                 # resident output
        # Per streamed row, double-buffered: lane-padded x block + (row, 1)
        # int32 target block (lane-padded to 128 in VMEM).
        per_row = 2 * c_pad * itemsize + 2 * _LANES * 4
        avail = max(0, vmem_budget - temps - out_block - (1 << 20))
        rows = max(chunk, (avail // per_row) // _SUBLANES * _SUBLANES)
        tile_n = min(rows, n_pad)
        tile_n = max(_SUBLANES, _round_up(tile_n, _SUBLANES))
        if tile_n > chunk:
            tile_n = max(chunk, tile_n // chunk * chunk)
    else:
        # Test/debug override.
        tile_n = max(_SUBLANES, _round_up(min(tile_rows, n_pad), _SUBLANES))

    chunk = min(chunk, tile_n)
    while tile_n % chunk:        # both are multiples of 8, so this terminates
        chunk -= _SUBLANES
    return tile_n, chunk


def _hinge_loss_kernel(x_ref, t_ref, o_ref, *, margin, n_total, tile_n,
                       rows_per_chunk, tiles_per_core):
    core = pl.program_id(0)
    j = pl.program_id(1)

    # Per-core (8, C) partial block stays resident across the 'arbitrary' axis.
    @pl.when(j == 0)
    def _():
        o_ref[...] = jnp.zeros_like(o_ref)

    c = x_ref.shape[1]
    num_chunks = tile_n // rows_per_chunk
    base_row = (core * tiles_per_core + j) * tile_n

    # Hoisted broadcasts (JAX does not CSE broadcast_in_dim inside the loop).
    col = lax.broadcasted_iota(jnp.int32, (rows_per_chunk, c), 1)
    sub = lax.broadcasted_iota(jnp.int32, (rows_per_chunk, 1), 0)

    def body(i, acc):
        r0 = pl.multiple_of(i * rows_per_chunk, rows_per_chunk)
        x = x_ref[pl.ds(r0, rows_per_chunk), :].astype(jnp.float32)  # (rows, C)
        t = t_ref[pl.ds(r0, rows_per_chunk), :]                      # (rows, 1)
        # x[n, y_n] via one-hot masked lane reduce (the only XLU lane reduce).
        x_y = jnp.sum(jnp.where(col == t, x, 0.0), axis=-1, keepdims=True)
        # Hinge over ALL classes; the i == y_n term equals max(margin, 0) per
        # valid row and is subtracted once at finalize time in the wrapper.
        hinge = jnp.maximum(0.0, margin - x_y + x)
        # Mask rows beyond the true batch (tail tiles / clamped OOB tiles).
        row = base_row + r0 + sub
        hinge = jnp.where(row < n_total, hinge, 0.0)
        # Fold 8-row groups into the (8, C) partial with pure VALU vreg adds.
        return acc + jnp.sum(
            hinge.reshape(rows_per_chunk // _SUBLANES, _SUBLANES, c), axis=0)

    acc = lax.fori_loop(0, num_chunks, body,
                        jnp.zeros((_SUBLANES, c), jnp.float32))
    o_ref[...] += acc


def hinge_loss(x, target, delta=1.0, *, tile_rows=None):
    """nn.MultiMarginLoss(p=1, margin=delta, reduction='mean').

    x: (N, C) float32/bfloat16 logits; target: (N,) integer class indices.
    `tile_rows` is a test/debug override of the streamed batch-tile height.
    """
    n, c = x.shape
    margin = float(delta)
    t2d = target.astype(jnp.int32).reshape(n, 1)

    num_cores, vmem_budget, vmem_limit = _device_config()
    tile_n, chunk = _plan_tiles(n, c, x.dtype.itemsize, vmem_budget, tile_rows)

    num_tiles = pl.cdiv(n, tile_n)
    tiles_per_core = pl.cdiv(num_tiles, num_cores)

    def in_map(core, j):
        # Clamp fully-out-of-range logical tiles onto the last real tile; their
        # rows are masked out in-kernel so the data content is irrelevant.
        return (jnp.minimum(core * tiles_per_core + j, num_tiles - 1), 0)

    kernel = functools.partial(
        _hinge_loss_kernel, margin=margin, n_total=n, tile_n=tile_n,
        rows_per_chunk=chunk, tiles_per_core=tiles_per_core)

    partials = pl.pallas_call(
        kernel,
        out_shape=jax.ShapeDtypeStruct((num_cores * _SUBLANES, c), jnp.float32),
        grid_spec=pltpu.PrefetchScalarGridSpec(
            num_scalar_prefetch=0,
            grid=(num_cores, tiles_per_core),
            in_specs=[
                pl.BlockSpec((tile_n, c), in_map),
                pl.BlockSpec((tile_n, 1), in_map),
            ],
            out_specs=pl.BlockSpec((_SUBLANES, c), lambda core, j: (core, 0)),
        ),
        compiler_params=pltpu.CompilerParams(
            dimension_semantics=("parallel", "arbitrary"),
            vmem_limit_bytes=vmem_limit),
        cost_estimate=pl.CostEstimate(
            flops=5 * n * c,
            transcendentals=0,
            bytes_accessed=n * c * x.dtype.itemsize + n * 4
            + num_cores * _SUBLANES * c * 4),
    )(x, t2d)

    total = jnp.sum(partials)
    # Remove the i == y_n hinge terms (each exactly max(margin, 0)) and
    # normalize: mean over batch of (1/C) * sum_{i != y} hinge.
    return (total - n * max(margin, 0.0)) / (n * c)


def hinge_loss_ref(x, target, delta=1.0):
    x = x.astype(jnp.float32)
    n, c = x.shape
    onehot = jax.nn.one_hot(target, c, dtype=x.dtype)
    x_y = jnp.sum(x * onehot, axis=-1, keepdims=True)
    m = jnp.maximum(0.0, delta - x_y + x) * (1.0 - onehot)
    return jnp.mean(jnp.sum(m, axis=-1) / c)


if __name__ == "__main__":
    key = jax.random.PRNGKey(0)
    k1, k2, k3, k4 = jax.random.split(key, 4)

    # Case 1: small single-tile problem.
    N1, C1 = 8, 32
    x1 = jax.random.normal(k1, (N1, C1), dtype=jnp.float32)
    t1 = jax.random.randint(k2, (N1,), 0, C1, dtype=jnp.int32)
    out1 = hinge_loss(x1, t1, delta=1.0)
    jax.block_until_ready(out1)
    ref1 = hinge_loss_ref(x1, t1, delta=1.0)
    assert jnp.allclose(out1, ref1, atol=1e-5, rtol=1e-5), (out1, ref1)

    # Case 2: batch not a multiple of the tile — exercises the multi-tile grid,
    # tail-row masking and (on 2-TC chips) the clamped out-of-range tile.
    N2, C2 = 20, 32
    x2 = jax.random.normal(k3, (N2, C2), dtype=jnp.float32)
    t2 = jax.random.randint(k4, (N2,), 0, C2, dtype=jnp.int32)
    out2 = hinge_loss(x2, t2, delta=1.0, tile_rows=8)
    jax.block_until_ready(out2)
    ref2 = hinge_loss_ref(x2, t2, delta=1.0)
    assert jnp.allclose(out2, ref2, atol=1e-5, rtol=1e-5), (out2, ref2)

    # Case 3: bf16 input streamed at native width (cast to f32 inside kernel).
    x3 = x2.astype(jnp.bfloat16)
    out3 = hinge_loss(x3, t2, delta=1.0)
    jax.block_until_ready(out3)
    ref3 = hinge_loss_ref(x3, t2, delta=1.0)
    assert jnp.allclose(out3, ref3, atol=1e-4, rtol=1e-4), (out3, ref3)

    print("KERNEL_OK")
</pallas_src>

<mosaic_0001>
module attributes {stable_mosaic.version = 11 : i64} {
  func.func @_hinge_loss_kernel(%arg0: i32, %arg1: i32, %arg2: memref<8x32xf32, #tpu.memory_space<vmem>>, %arg3: memref<8x1xi32, #tpu.memory_space<vmem>>, %arg4: memref<8x32xf32, #tpu.memory_space<vmem>>) attributes {dimension_semantics = [#tpu.dimension_semantics<parallel>, #tpu.dimension_semantics<arbitrary>], iteration_bounds = array<i64: 1, 1>, scalar_prefetch = 0 : i64, scratch_operands = 0 : i64, tpu.core_type = #tpu.core_type<tc>, window_params = [{transform_indices = @transform_0, window_bounds = array<i64: 8, 32>}, {transform_indices = @transform_1, window_bounds = array<i64: 8, 1>}, {transform_indices = @transform_2, window_bounds = array<i64: 8, 32>}]} {
    %c0_i32 = arith.constant 0 : i32
    %0 = arith.cmpi eq, %arg1, %c0_i32 : i32
    %1 = arith.extui %0 : i1 to i32
    %c0_i32_0 = arith.constant 0 : i32
    %2 = arith.cmpi ne, %1, %c0_i32_0 : i32
    scf.if %2 {
      %cst_16 = arith.constant 0.000000e+00 : f32
      %42 = vector.broadcast %cst_16 : f32 to vector<8x32xf32>
      %c0_17 = arith.constant 0 : index
      %c0_18 = arith.constant 0 : index
      %43 = vector.load %arg4[%c0_17, %c0_18] : memref<8x32xf32, #tpu.memory_space<vmem>>, vector<8x32xf32>
      tpu.vector_store %arg4[%c0_17, %c0_18], %42 {strides = array<i32>} : memref<8x32xf32, #tpu.memory_space<vmem>>, vector<8x32xf32>,
    } else {
    }
    %c1_i32 = arith.constant 1 : i32
    %3 = arith.muli %arg0, %c1_i32 : i32
    %4 = arith.addi %3, %arg1 : i32
    %c8_i32 = arith.constant 8 : i32
    %5 = arith.muli %4, %c8_i32 : i32
    %6 = tpu.iota {dimensions = array<i32: 1>} : vector<8x32xi32>
    %7 = tpu.iota {dimensions = array<i32: 0>} : vector<8x1xi32>
    %cst = arith.constant 0.000000e+00 : f32
    %8 = vector.broadcast %cst : f32 to vector<8x32xf32>
    %c0_i32_1 = arith.constant 0 : i32
    %c8_i32_2 = arith.constant 8 : i32
    %9 = arith.muli %c0_i32_1, %c8_i32_2 : i32
    %10 = tpu.assume_multiple %9, 8 : i32
    %11 = arith.index_cast %10 : i32 to index
    %c0 = arith.constant 0 : index
    %12 = vector.load %arg2[%11, %c0] : memref<8x32xf32, #tpu.memory_space<vmem>>, vector<8x32xf32>
    %13 = arith.index_cast %10 : i32 to index
    %c0_3 = arith.constant 0 : index
    %14 = vector.load %arg3[%13, %c0_3] : memref<8x1xi32, #tpu.memory_space<vmem>>, vector<8x1xi32>
    %15 = vector.broadcast %14 : vector<8x1xi32> to vector<8x32xi32>
    %16 = arith.cmpi eq, %6, %15 : vector<8x32xi32>
    %cst_4 = arith.constant 0.000000e+00 : f32
    %17 = vector.broadcast %cst_4 : f32 to vector<8x32xf32>
    %18 = arith.select %16, %12, %17 : vector<8x32xi1>, vector<8x32xf32>
    %cst_5 = arith.constant dense<0.000000e+00> : vector<8xf32>
    %19 = vector.multi_reduction <add>, %18, %cst_5 [1] : vector<8x32xf32> to vector<8xf32>
    %20 = vector.shape_cast %19 : vector<8xf32> to vector<8x1xf32>
    %cst_6 = arith.constant 1.000000e+00 : f32
    %21 = vector.broadcast %cst_6 : f32 to vector<8x1xf32>
    %22 = arith.subf %21, %20 : vector<8x1xf32>
    %23 = vector.broadcast %22 : vector<8x1xf32> to vector<8x32xf32>
    %24 = arith.addf %23, %12 : vector<8x32xf32>
    %cst_7 = arith.constant 0.000000e+00 : f32
    %25 = vector.broadcast %cst_7 : f32 to vector<8x32xf32>
    %26 = arith.maximumf %25, %24 : vector<8x32xf32>
    %27 = arith.addi %5, %10 : i32
    %28 = vector.broadcast %27 : i32 to vector<8x1xi32>
    %29 = arith.addi %28, %7 : vector<8x1xi32>
    %c8_i32_8 = arith.constant 8 : i32
    %30 = vector.broadcast %c8_i32_8 : i32 to vector<8x1xi32>
    %31 = arith.cmpi slt, %29, %30 : vector<8x1xi32>
    %cst_9 = arith.constant 0.000000e+00 : f32
    %32 = vector.shape_cast %31 : vector<8x1xi1> to vector<8x1xi1>
    %33 = vector.broadcast %32 : vector<8x1xi1> to vector<8x32xi1>
    %34 = vector.broadcast %cst_9 : f32 to vector<8x32xf32>
    %35 = arith.select %33, %26, %34 : vector<8x32xi1>, vector<8x32xf32>
    %36 = vector.shape_cast %35 : vector<8x32xf32> to vector<1x8x32xf32>
    %cst_10 = arith.constant dense<0.000000e+00> : vector<8x32xf32>
    %37 = vector.multi_reduction <add>, %36, %cst_10 [0] : vector<1x8x32xf32> to vector<8x32xf32>
    %38 = arith.addf %8, %37 : vector<8x32xf32>
    %c1_i32_11 = arith.constant 1 : i32
    %c0_12 = arith.constant 0 : index
    %c0_13 = arith.constant 0 : index
    %39 = vector.load %arg4[%c0_12, %c0_13] : memref<8x32xf32, #tpu.memory_space<vmem>>, vector<8x32xf32>
    %40 = arith.addf %39, %38 : vector<8x32xf32>
    %c0_14 = arith.constant 0 : index
    %c0_15 = arith.constant 0 : index
    %41 = vector.load %arg4[%c0_14, %c0_15] : memref<8x32xf32, #tpu.memory_space<vmem>>, vector<8x32xf32>
    tpu.vector_store %arg4[%c0_14, %c0_15], %40 {strides = array<i32>} : memref<8x32xf32, #tpu.memory_space<vmem>>, vector<8x32xf32>,
    return
  }
  func.func @transform_0(%arg0: i32, %arg1: i32) -> (i32, i32) {
    %c1_i32 = arith.constant 1 : i32
    %0 = arith.muli %arg0, %c1_i32 : i32
    %1 = arith.addi %0, %arg1 : i32
    %c0_i32 = arith.constant 0 : i32
    %2 = arith.minsi %1, %c0_i32 : i32
    %c0_i32_0 = arith.constant 0 : i32
    %c0_i32_1 = arith.constant 0 : i32
    return %2, %c0_i32_0 : i32, i32
  }
  func.func @transform_1(%arg0: i32, %arg1: i32) -> (i32, i32) {
    %c1_i32 = arith.constant 1 : i32
    %0 = arith.muli %arg0, %c1_i32 : i32
    %1 = arith.addi %0, %arg1 : i32
    %c0_i32 = arith.constant 0 : i32
    %2 = arith.minsi %1, %c0_i32 : i32
    %c0_i32_0 = arith.constant 0 : i32
    %c0_i32_1 = arith.constant 0 : i32
    return %2, %c0_i32_0 : i32, i32
  }
  func.func @transform_2(%arg0: i32, %arg1: i32) -> (i32, i32) {
    %c0_i32 = arith.constant 0 : i32
    %c0_i32_0 = arith.constant 0 : i32
    return %arg0, %c0_i32 : i32, i32
  }
}

</mosaic_0001>

<llo_original>
// kernel: tpu_custom_call.1
$region0: #{tpu_custom_call.1}
  #allocation0 [shape = 'u32[]', space=smem, size = 0x4, offset = 0x4, fixed_abs, tag = 'smem constant byte address 0x4 - core index']
  #allocation1 [shape = 'u32[144,128]{1,0:T(1,128)}', space=vmem, size = 0x12000, scoped, tag = 'internal scratch']
  %s0 = inlined_call_operand.vmem [shape: f32[8,32], index: 0, kind: input, shape index: {}]
  %s1 = inlined_call_operand.vmem [shape: s32[8,1], index: 1, kind: input, shape index: {}]
  %s2 = inlined_call_operand.hbm [shape: f32[8,32], index: 2, kind: output, shape index: {}]
  %s3 = sld [smem:[#allocation0]]
  $region22: #{tpu_custom_call.1} parent=0
    _
  %s5 = ssub.s32 1, %s3
  %s6 = scalar_select 0, %s5, %s3
  $region1: #{tpu_custom_call.1} parent=0
    #allocation2 [shape = 'u8[4096]{0}', space=vmem, size = 0x1000, scoped, tag = 'output window, operand 0, single buffered']
    #allocation3 [shape = 's32[1]{0}', space=sflag, size = 0x4, scoped, tag = 'scoped memory for tpu_custom_call.1']
    %7 = vsyncpa [#allocation3], 0
    // Predicated region
    $region2: #{tpu_custom_call.1} parent=1 // pred_check
      _
    $region3: #{tpu_custom_call.1} parent=1 // pred_check_branch
      %9 = sbr.rel (0) target = $region5
    $region4: #{tpu_custom_call.1} parent=1 // pred_region
      %s10 = sadd.s32 0, 0
      %p11 = scmp.lt.s32.totalorder %s10, 0
      %s12 = scalar_select %p11, %s10, 0
      %p13 = scmp.lt.s32.totalorder %s12, 0
      %s14 = scalar_select %p13, %s12, 0
      %s15 = smul.addr %s14, 8
      %s16 = scalar_lea.vmem %s0, %s15
      %s17 = sadd.s32 0, 0
      %p18 = scmp.lt.s32.totalorder %s17, 0
      %s19 = scalar_select %p18, %s17, 0
    $region5: #{tpu_custom_call.1} parent=1 // pred_fallthru
      _
    // Predicated region
    $region6: #{tpu_custom_call.1} parent=1 // pred_check
      _
    $region7: #{tpu_custom_call.1} parent=1 // pred_check_branch
      %21 = sbr.rel (0) target = $region9
    $region8: #{tpu_custom_call.1} parent=1 // pred_region
      %s22 = sadd.s32 0, 0
      %p23 = scmp.lt.s32.totalorder %s22, 0
      %s24 = scalar_select %p23, %s22, 0
      %p25 = scmp.lt.s32.totalorder %s24, 0
      %s26 = scalar_select %p25, %s24, 0
      %s27 = smul.addr %s26, 8
      %s28 = scalar_lea.vmem %s1, %s27
      %s29 = sadd.s32 0, 0
      %p30 = scmp.lt.s32.totalorder %s29, 0
      %s31 = scalar_select %p30, %s29, 0
    $region9: #{tpu_custom_call.1} parent=1 // pred_fallthru
      _
    %s32 = sadd.s32 0, 0
    %p33 = scmp.lt.s32.totalorder %s32, 0
    %s34 = scalar_select %p33, %s32, 0
    %p35 = scmp.lt.s32.totalorder %s34, 0
    %s36 = scalar_select %p35, %s34, 0
    %s37 = smul.addr %s36, 8
    %s38 = scalar_lea.vmem %s0, %s37
    %s39 = sadd.s32 0, 0
    %p40 = scmp.lt.s32.totalorder %s39, 0
    %s41 = scalar_select %p40, %s39, 0
    %p42 = scmp.lt.s32.totalorder %s41, 0
    %s43 = scalar_select %p42, %s41, 0
    %s44 = smul.addr %s43, 8
    %s45 = scalar_lea.vmem %s1, %s44
    %s46 = sadd.s32 0, 0
    %p47 = scmp.lt.s32.totalorder %s46, 0
    %s48 = scalar_select %p47, %s46, 0
    %p49 = scmp.lt.s32.totalorder %s48, 0
    %s50 = scalar_select %p49, %s48, 0
    %s51 = smul.addr %s50, 8
    %s52 = scalar_lea.vmem %s0, %s51
    %s53 = sadd.s32 0, 0
    %p54 = scmp.lt.s32.totalorder %s53, 0
    %s55 = scalar_select %p54, %s53, 0
    %s56 = sadd.s32 0, 0
    %p57 = scmp.lt.s32.totalorder %s56, 0
    %s58 = scalar_select %p57, %s56, 0
    %p59 = scmp.lt.s32.totalorder %s58, 0
    %s60 = scalar_select %p59, %s58, 0
    %s61 = smul.addr %s60, 8
    %s62 = scalar_lea.vmem %s1, %s61
    %s63 = sadd.s32 0, 0
    %p64 = scmp.lt.s32.totalorder %s63, 0
    %s65 = scalar_select %p64, %s63, 0
    %p66 = scmp.eq.s32.totalorder 0, 0
    // Predicated region
    $region10: #{tpu_custom_call.1} parent=1 // pred_check
      %p67 = pneg %p66
    $region11: #{tpu_custom_call.1} parent=1 // pred_check_branch
      %69 = sbr.rel (%p67) target = $region13
    $region12: #{tpu_custom_call.1} parent=1 // pred_region
      %vm70 = vcmask 261120
      %71 = vst.msk [vmem:[#allocation2] sm:$0xff] %vm70, 0.0
    $region13: #{tpu_custom_call.1} parent=1 // pred_fallthru
      _
    %s72 = sadd.s32 0, 0
    %s73 = smul.u32 %s72, 8
    %v74 = vlaneseq
    %v75 = vand.u32 %v74, 127
    %v76 = vlaneseq
    %v77 = vshrl.u32 %v76, 7
    %v78 = vld [vmem:[%s52] sm:$0xff]
    %v79 = vld [vmem:[%s62] sm:$0xff]
    %80 = vset.pattern.permute.xlu0 0
    %81 = vperm.xlu0 %80, %v79
    %v82 = vpop.permute.xlu0 %81
    %vm83 = vcmp.eq.s32.totalorder %v75, %v82
    %v84 = vsel %vm83, %v78, 0.0
    %vm85 = vcmask 261120
    %v86 = vsel %vm85, %v84, 0.0
    %87 = vadd.xlane.f32.xlu0 %v86
    %v88 = vpop.xlane.xlu0 %87
    %v89 = vsub.f32 1.0, %v88
    %v90 = vadd.f32 %v89, %v78
    %v91 = vmax.f32 %v90, 0.0
    %s92 = sadd.s32 %s73, 0
    %v93 = vstv %s92
    %v94 = vadd.s32 %v93, %v77
    %vm95 = vcmp.lt.s32.totalorder %v94, 8
    %v96 = vsel %vm95, 1, 0
    %vm97 = vcmp.eq.s32.totalorder %v96, 1
    %v98 = vsel %vm97, %v91, 0.0
    %v99 = vadd.f32 %v98, 0.0
    %v100 = vadd.f32 %v99, 0.0
    %v101 = vld [vmem:[#allocation2] sm:$0xff]
    %v102 = vadd.f32 %v101, %v100
    %103 = vst.msk [vmem:[#allocation2] sm:$0xff] %vm85, %v102
    // Predicated region
    $region14: #{tpu_custom_call.1} parent=1 // pred_check
      _
    $region15: #{tpu_custom_call.1} parent=1 // pred_check_branch
      %105 = sbr.rel (0) target = $region17
    $region16: #{tpu_custom_call.1} parent=1 // pred_region
      %s107 = ssub.s32 128, 128
      %108 = vsyncadd [#allocation3], %s107
      %s110 = sshll.u32 [#allocation2], 4
      %s111 = int_to_ptr.vmem [resolvable:$true] %s110
      %113 = dma.vmem_to_hbm [thread:$0]  %s111, 128, %s2, [#allocation3]
    $region17: #{tpu_custom_call.1} parent=1 // pred_fallthru
      _
    // Predicated region
    $region18: #{tpu_custom_call.1} parent=1 // pred_check
      _
    $region19: #{tpu_custom_call.1} parent=1 // pred_check_branch
      %115 = sbr.rel (0) target = $region21
    $region20: #{tpu_custom_call.1} parent=1 // pred_region
      %116 = dma.done [#allocation3], 128
    $region21: #{tpu_custom_call.1} parent=1 // pred_fallthru
      _
    %117 = vsyncpa [#allocation3], 1

</llo_original>
